<compile_context>
chip_gen: v7x
topology: tpu7x:2x2x1
jax: 0.10.0
libtpu: 0.0.40
codegen_flags: <defaults>
</compile_context>

<pallas_src>
import functools

import jax
import jax.numpy as jnp
from jax.experimental import pallas as pl
from jax.experimental.pallas import tpu as pltpu


def _round_up(x, m):
    return -(-x // m) * m


def _vmem_limit_bytes():
    """64 MiB scope on chips with 128 MiB physical VMEM (v5e/v6e), else 32 MiB."""
    try:
        cap = int(getattr(pltpu.get_tpu_info(), "vmem_capacity_bytes", 0))
    except Exception:  # query unavailable -> conservative default (v7x-safe)
        cap = 0
    return (64 if cap >= 100 * 1024 * 1024 else 32) * 1024 * 1024


def _downblock_kernel(w_ref, b_ref, xc_ref, xh_ref, o_ref, *, wq, tile_m):
    # w_ref : (4, Cout_pad, 4*Cin)  bf16  resident across the grid
    # b_ref : (Cout_pad, 1)         f32   resident
    # xc_ref: (4*Cin, TILE_M)       bf16  current output-tile input window
    # xh_ref: (4*Cin, HALO)         bf16  right halo (next HALO lanes)
    # o_ref : (Cout_pad, TILE_M)    out dtype, lane-dense (TILE_M % 128 == 0)
    #
    # Flat output coordinate m' = ho*Wq + wo (column Wq-1 of each row is a
    # ghost, dropped by the wrapper).  Tap group (a, b) contributes
    #   out[:, m'] += W_ab @ X[:, m' + a*Wq + b]
    # i.e. a statically shifted slice of the VMEM-resident (current ++ halo)
    # window.  These on-chip shifts *are* the im2col — no HBM patch array.
    x = jnp.concatenate([xc_ref[...], xh_ref[...]], axis=-1)
    acc = jnp.dot(w_ref[0], x[:, :tile_m], preferred_element_type=jnp.float32)
    for g, off in ((1, 1), (2, wq), (3, wq + 1)):
        acc = acc + jnp.dot(w_ref[g], x[:, off:off + tile_m],
                            preferred_element_type=jnp.float32)
    acc = acc + b_ref[...]                       # bias broadcast over lanes
    # LeakyReLU(0.2): max(x, 0.2x) == where(x >= 0, x, 0.2x); one vmul + vmax.
    o_ref[...] = jnp.maximum(acc, 0.2 * acc).astype(o_ref.dtype)


def down_block(x, weight, bias, *, stride=2, padding=1,
               mxu_dtype=jnp.bfloat16, out_dtype=jnp.bfloat16):
    """DownBlock forward: Conv2d(k=4, s=2, p=1) -> LeakyReLU(0.2).

    x: (N, Cin, H, W) NCHW; weight: (Cout, Cin, 4, 4) OIHW; bias: (Cout,).
    Returns (N, Cout, Ho, Wo) in `out_dtype`.
    """
    n, cin, h, w = x.shape
    cout, cin_w, k, k2 = weight.shape
    assert (k, k2) == (4, 4) and stride == 2 and padding == 1 and cin_w == cin, \
        "kernel is specialized to the DownBlock defaults k=4, s=2, p=1"

    ho = (h + 2 * padding - k) // stride + 1
    wo = (w + 2 * padding - k) // stride + 1

    # ---- wrapper-side layout plumbing (~1x input bytes, bf16) ---------------
    # Cast first (halves every subsequent pass), pad for the conv and to make
    # H/W even, then space-to-depth: P[(pi,pj,c), r*Wq+s] = xp[c, 2r+pi, 2s+pj].
    hp = _round_up(h + 2 * padding, 2)
    wp = _round_up(w + 2 * padding, 2)
    xp = jnp.pad(x.astype(mxu_dtype),
                 ((0, 0), (0, 0),
                  (padding, hp - h - padding), (padding, wp - w - padding)))
    hq, wq = hp // 2, wp // 2
    ph = xp.reshape(n, cin, hq, 2, wq, 2)
    ph = ph.transpose(0, 3, 5, 1, 2, 4).reshape(n, 4 * cin, hq * wq)

    gin = 4 * cin                    # contraction depth of one tap-group matmul
    m_out = ho * wq                  # flat output length incl. ghost columns
    l_in = hq * wq

    # ---- tiling (lane-dense, VMEM-budget derived) ----------------------------
    cout_pad = _round_up(cout, 16)   # bf16 packs 16 sublane rows per vreg
    out_bytes = jnp.dtype(out_dtype).itemsize
    halo = _round_up(wq + 1, 128)    # covers the largest tap shift (wq + 1)
    vmem_limit = _vmem_limit_bytes()
    # Bytes per output lane: 2x double-buffered bf16 input tile, ~2 shifted
    # slice temporaries, 2x output tile, f32 accumulator.  Fixed: weights
    # (budgeted at 2 copies), halo buffers, bias, slack.
    per_m = (2 + 2) * gin * 2 + 2 * cout_pad * out_bytes + cout_pad * 4
    fixed = 2 * (4 * cout_pad * gin * 2) + 2 * (gin * halo * 2) \
        + 2 * cout_pad * 4 + (1 << 20)
    tile_m = max((int(vmem_limit * 0.7) - fixed) // per_m, halo)
    tile_m = min(tile_m, 2048, _round_up(m_out, halo))   # ~roofline knee cap
    tile_m = max((tile_m // halo) * halo, halo)          # multiple of halo/128

    nm = pl.cdiv(m_out, tile_m)      # every tile is full-width (pad, not mask)
    m_pad = nm * tile_m
    l_pad = m_pad + halo             # halo block of the last tile stays in range
    assert l_pad >= l_in
    ph = jnp.pad(ph, ((0, 0), (0, 0), (0, l_pad - l_in)))

    # ---- weights / bias ------------------------------------------------------
    # (co, c, i, j), i = 2a+pi, j = 2b+pj  ->  W[(a,b), co, (pi,pj,c)] so each
    # tap group (a, b) is one (Cout_pad, 4*Cin) MXU operand matching the phase
    # ordering of the input channel-group axis.
    w6 = weight.astype(mxu_dtype).reshape(cout, cin, 2, 2, 2, 2)
    wg = w6.transpose(2, 4, 0, 3, 5, 1).reshape(4, cout, gin)
    wg = jnp.pad(wg, ((0, 0), (0, cout_pad - cout), (0, 0)))
    bg = jnp.pad(bias.astype(jnp.float32),
                 (0, cout_pad - cout)).reshape(cout_pad, 1)

    # NOTE: at tiny shapes (like the self-test below) the ~0.35us/step launch
    # overhead dominates; MXU efficiency needs Cout >= 128 and Cin*k*k >= 256.
    grid = (n, nm)
    kernel = functools.partial(_downblock_kernel, wq=wq, tile_m=tile_m)

    cost = pl.CostEstimate(
        flops=8 * n * cout_pad * gin * m_pad,
        transcendentals=0,
        bytes_accessed=(n * gin * (m_pad + nm * halo) * 2     # fused input reads
                        + 4 * cout_pad * gin * 2              # weights
                        + cout_pad * 4                        # bias
                        + n * cout_pad * m_pad * out_bytes))  # output

    out = pl.pallas_call(
        kernel,
        out_shape=jax.ShapeDtypeStruct((n, cout_pad, m_pad), out_dtype),
        grid=grid,
        in_specs=[
            pl.BlockSpec((4, cout_pad, gin), lambda b, i: (0, 0, 0)),   # weights
            pl.BlockSpec((cout_pad, 1), lambda b, i: (0, 0)),           # bias
            pl.BlockSpec((None, gin, tile_m), lambda b, i: (b, 0, i)),  # cur tile
            pl.BlockSpec((None, gin, halo),                             # halo
                         lambda b, i: (b, 0, (i + 1) * (tile_m // halo))),
        ],
        out_specs=pl.BlockSpec((None, cout_pad, tile_m), lambda b, i: (b, 0, i)),
        compiler_params=pltpu.CompilerParams(
            dimension_semantics=("parallel", "parallel"),
            vmem_limit_bytes=vmem_limit),
        cost_estimate=cost,
    )(wg, bg, ph, ph)

    # Drop pad channels / pad lanes / ghost columns -> NCHW.
    out = out[:, :cout, :m_out].reshape(n, cout, ho, wq)[:, :, :, :wo]
    return out


def _reference(x, weight, bias, stride=2, padding=1, mxu_dtype=jnp.float32):
    out = jax.lax.conv_general_dilated(
        x.astype(mxu_dtype), weight.astype(mxu_dtype),
        window_strides=(stride, stride),
        padding=[(padding, padding), (padding, padding)],
        dimension_numbers=("NCHW", "OIHW", "NCHW"),
        preferred_element_type=jnp.float32)
    out = out + bias.reshape(1, -1, 1, 1)
    return jnp.where(out >= 0, out, 0.2 * out)


if __name__ == "__main__":
    in_channels, out_channels = 4, 8
    kernel_size, stride, padding = 4, 2, 1

    key = jax.random.PRNGKey(0)
    kx, kw, kb = jax.random.split(key, 3)
    x = jax.random.normal(kx, (2, in_channels, 16, 16), dtype=jnp.float32)
    # Deterministic parameter init (shapes match nn.Conv2d(4, 8, 4, 2, 1)).
    fan_in = in_channels * kernel_size * kernel_size
    bound = 1.0 / float(fan_in) ** 0.5
    weight = jax.random.uniform(
        kw, (out_channels, in_channels, kernel_size, kernel_size),
        minval=-bound, maxval=bound, dtype=jnp.float32)
    bias = jax.random.uniform(
        kb, (out_channels,), minval=-bound, maxval=bound, dtype=jnp.float32)

    out = down_block(x, weight, bias)
    out = jax.block_until_ready(out)
    assert out.shape == (2, out_channels, 8, 8), out.shape
    out_f32 = out.astype(jnp.float32)

    # Apples-to-apples: reference conv on the same bf16 operands (f32 accum).
    ref_bf16 = _reference(x, weight, bias, stride, padding,
                          mxu_dtype=jnp.bfloat16)
    assert jnp.allclose(out_f32, ref_bf16, atol=2e-2, rtol=2e-2), \
        "mismatch vs bf16-operand reference"

    # Loose sanity check against the full-f32 convolution.
    ref_f32 = _reference(x, weight, bias, stride, padding,
                         mxu_dtype=jnp.float32)
    assert jnp.allclose(out_f32, ref_f32, atol=1e-1, rtol=1e-1), \
        "mismatch vs f32 reference"

    print("KERNEL_OK")
</pallas_src>

<mosaic_0001>
module attributes {stable_mosaic.version = 11 : i64} {
  func.func @_downblock_kernel(%arg0: i32, %arg1: i32, %arg2: memref<4x16x16xbf16, #tpu.memory_space<vmem>>, %arg3: memref<16x1xf32, #tpu.memory_space<vmem>>, %arg4: memref<1x16x128xbf16, #tpu.memory_space<vmem>>, %arg5: memref<1x16x128xbf16, #tpu.memory_space<vmem>>, %arg6: memref<1x16x128xbf16, #tpu.memory_space<vmem>>) attributes {dimension_semantics = [#tpu.dimension_semantics<parallel>, #tpu.dimension_semantics<parallel>], iteration_bounds = array<i64: 2, 1>, scalar_prefetch = 0 : i64, scratch_operands = 0 : i64, tpu.core_type = #tpu.core_type<tc>, window_params = [{pipeline_mode = #tpu.pipeline_mode<synchronous>, transform_indices = @transform_0, window_bounds = array<i64: 4, 16, 16>}, {pipeline_mode = #tpu.pipeline_mode<synchronous>, transform_indices = @transform_1, window_bounds = array<i64: 16, 1>}, {transform_indices = @transform_2, window_bounds = array<i64: 1, 16, 128>}, {transform_indices = @transform_3, window_bounds = array<i64: 1, 16, 128>}, {transform_indices = @transform_4, window_bounds = array<i64: 1, 16, 128>}]} {
    %c0 = arith.constant 0 : index
    %c0_0 = arith.constant 0 : index
    %c0_1 = arith.constant 0 : index
    %0 = vector.load %arg4[%c0, %c0_0, %c0_1] : memref<1x16x128xbf16, #tpu.memory_space<vmem>>, vector<1x16x128xbf16>
    %1 = vector.shape_cast %0 : vector<1x16x128xbf16> to vector<16x128xbf16>
    %c0_2 = arith.constant 0 : index
    %c0_3 = arith.constant 0 : index
    %c0_4 = arith.constant 0 : index
    %2 = vector.load %arg5[%c0_2, %c0_3, %c0_4] : memref<1x16x128xbf16, #tpu.memory_space<vmem>>, vector<1x16x128xbf16>
    %3 = vector.shape_cast %2 : vector<1x16x128xbf16> to vector<16x128xbf16>
    %4 = tpu.concatenate %1, %3 in 1 : vector<16x128xbf16>, vector<16x128xbf16> -> vector<16x256xbf16>
    %c0_5 = arith.constant 0 : index
    %c0_6 = arith.constant 0 : index
    %c0_7 = arith.constant 0 : index
    %5 = vector.load %arg2[%c0_5, %c0_6, %c0_7] : memref<4x16x16xbf16, #tpu.memory_space<vmem>>, vector<1x16x16xbf16>
    %6 = vector.shape_cast %5 : vector<1x16x16xbf16> to vector<16x16xbf16>
    %7 = vector.extract_strided_slice %4 {offsets = [0, 0], sizes = [16, 128], strides = [1, 1]} : vector<16x256xbf16> to vector<16x128xbf16>
    %cst = arith.constant dense<0.000000e+00> : vector<16x128xf32>
    %8 = tpu.matmul %6, %7, %cst {dimension_numbers = #tpu.dot_dimension_numbers<[1], [0], [0], [1], [0, 0, 1, 1], [], []>} : vector<16x16xbf16>, vector<16x128xbf16>, vector<16x128xf32> -> vector<16x128xf32>
    %c1 = arith.constant 1 : index
    %c0_8 = arith.constant 0 : index
    %c0_9 = arith.constant 0 : index
    %9 = vector.load %arg2[%c1, %c0_8, %c0_9] : memref<4x16x16xbf16, #tpu.memory_space<vmem>>, vector<1x16x16xbf16>
    %10 = vector.shape_cast %9 : vector<1x16x16xbf16> to vector<16x16xbf16>
    %11 = vector.extract_strided_slice %4 {offsets = [0, 1], sizes = [16, 128], strides = [1, 1]} : vector<16x256xbf16> to vector<16x128xbf16>
    %cst_10 = arith.constant dense<0.000000e+00> : vector<16x128xf32>
    %12 = tpu.matmul %10, %11, %cst_10 {dimension_numbers = #tpu.dot_dimension_numbers<[1], [0], [0], [1], [0, 0, 1, 1], [], []>} : vector<16x16xbf16>, vector<16x128xbf16>, vector<16x128xf32> -> vector<16x128xf32>
    %13 = arith.addf %8, %12 : vector<16x128xf32>
    %c2 = arith.constant 2 : index
    %c0_11 = arith.constant 0 : index
    %c0_12 = arith.constant 0 : index
    %14 = vector.load %arg2[%c2, %c0_11, %c0_12] : memref<4x16x16xbf16, #tpu.memory_space<vmem>>, vector<1x16x16xbf16>
    %15 = vector.shape_cast %14 : vector<1x16x16xbf16> to vector<16x16xbf16>
    %16 = vector.extract_strided_slice %4 {offsets = [0, 9], sizes = [16, 128], strides = [1, 1]} : vector<16x256xbf16> to vector<16x128xbf16>
    %cst_13 = arith.constant dense<0.000000e+00> : vector<16x128xf32>
    %17 = tpu.matmul %15, %16, %cst_13 {dimension_numbers = #tpu.dot_dimension_numbers<[1], [0], [0], [1], [0, 0, 1, 1], [], []>} : vector<16x16xbf16>, vector<16x128xbf16>, vector<16x128xf32> -> vector<16x128xf32>
    %18 = arith.addf %13, %17 : vector<16x128xf32>
    %c3 = arith.constant 3 : index
    %c0_14 = arith.constant 0 : index
    %c0_15 = arith.constant 0 : index
    %19 = vector.load %arg2[%c3, %c0_14, %c0_15] : memref<4x16x16xbf16, #tpu.memory_space<vmem>>, vector<1x16x16xbf16>
    %20 = vector.shape_cast %19 : vector<1x16x16xbf16> to vector<16x16xbf16>
    %21 = vector.extract_strided_slice %4 {offsets = [0, 10], sizes = [16, 128], strides = [1, 1]} : vector<16x256xbf16> to vector<16x128xbf16>
    %cst_16 = arith.constant dense<0.000000e+00> : vector<16x128xf32>
    %22 = tpu.matmul %20, %21, %cst_16 {dimension_numbers = #tpu.dot_dimension_numbers<[1], [0], [0], [1], [0, 0, 1, 1], [], []>} : vector<16x16xbf16>, vector<16x128xbf16>, vector<16x128xf32> -> vector<16x128xf32>
    %23 = arith.addf %18, %22 : vector<16x128xf32>
    %c0_17 = arith.constant 0 : index
    %c0_18 = arith.constant 0 : index
    %24 = vector.load %arg3[%c0_17, %c0_18] : memref<16x1xf32, #tpu.memory_space<vmem>>, vector<16x1xf32>
    %25 = vector.broadcast %24 : vector<16x1xf32> to vector<16x128xf32>
    %26 = arith.addf %23, %25 : vector<16x128xf32>
    %cst_19 = arith.constant 2.000000e-01 : f32
    %27 = vector.broadcast %cst_19 : f32 to vector<16x128xf32>
    %28 = arith.mulf %27, %26 : vector<16x128xf32>
    %29 = arith.maximumf %26, %28 : vector<16x128xf32>
    %30 = arith.truncf %29 : vector<16x128xf32> to vector<16x128xbf16>
    %c0_20 = arith.constant 0 : index
    %c0_21 = arith.constant 0 : index
    %c0_22 = arith.constant 0 : index
    %31 = vector.load %arg6[%c0_20, %c0_21, %c0_22] : memref<1x16x128xbf16, #tpu.memory_space<vmem>>, vector<1x16x128xbf16>
    %32 = vector.shape_cast %31 : vector<1x16x128xbf16> to vector<16x128xbf16>
    %33 = vector.shape_cast %30 : vector<16x128xbf16> to vector<1x16x128xbf16>
    tpu.vector_store %arg6[%c0_20, %c0_21, %c0_22], %33 {strides = array<i32>} : memref<1x16x128xbf16, #tpu.memory_space<vmem>>, vector<1x16x128xbf16>,
    return
  }
  func.func @transform_0(%arg0: i32, %arg1: i32) -> (i32, i32, i32) {
    %c0_i32 = arith.constant 0 : i32
    %c0_i32_0 = arith.constant 0 : i32
    %c0_i32_1 = arith.constant 0 : i32
    %c0_i32_2 = arith.constant 0 : i32
    return %c0_i32, %c0_i32_0, %c0_i32_1 : i32, i32, i32
  }
  func.func @transform_1(%arg0: i32, %arg1: i32) -> (i32, i32) {
    %c0_i32 = arith.constant 0 : i32
    %c0_i32_0 = arith.constant 0 : i32
    %c0_i32_1 = arith.constant 0 : i32
    return %c0_i32, %c0_i32_0 : i32, i32
  }
  func.func @transform_2(%arg0: i32, %arg1: i32) -> (i32, i32, i32) {
    %c0_i32 = arith.constant 0 : i32
    %c0_i32_0 = arith.constant 0 : i32
    return %arg0, %c0_i32, %arg1 : i32, i32, i32
  }
  func.func @transform_3(%arg0: i32, %arg1: i32) -> (i32, i32, i32) {
    %c1_i32 = arith.constant 1 : i32
    %0 = arith.addi %arg1, %c1_i32 : i32
    %c1_i32_0 = arith.constant 1 : i32
    %1 = arith.muli %0, %c1_i32_0 : i32
    %c0_i32 = arith.constant 0 : i32
    %c0_i32_1 = arith.constant 0 : i32
    return %arg0, %c0_i32, %1 : i32, i32, i32
  }
  func.func @transform_4(%arg0: i32, %arg1: i32) -> (i32, i32, i32) {
    %c0_i32 = arith.constant 0 : i32
    %c0_i32_0 = arith.constant 0 : i32
    return %arg0, %c0_i32, %arg1 : i32, i32, i32
  }
}

</mosaic_0001>

<llo_original>
// kernel: tpu_custom_call.1
$region0: #{tpu_custom_call.1}
  #allocation0 [shape = 'u32[]', space=smem, size = 0x4, offset = 0x4, fixed_abs, tag = 'smem constant byte address 0x4 - core index']
  #allocation1 [shape = 'u32[144,128]{1,0:T(1,128)}', space=vmem, size = 0x12000, scoped, tag = 'internal scratch']
  %s0 = inlined_call_operand.hbm [shape: bf16[4,16,16], index: 0, kind: input, shape index: {}]
  %s1 = inlined_call_operand.vmem [shape: f32[16,1], index: 1, kind: input, shape index: {}]
  %s2 = inlined_call_operand.hbm [shape: bf16[2,16,256], index: 2, kind: input, shape index: {}]
  %s3 = inlined_call_operand.hbm [shape: bf16[2,16,256], index: 3, kind: input, shape index: {}]
  %s4 = inlined_call_operand.hbm [shape: bf16[2,16,128], index: 4, kind: output, shape index: {}]
  %s5 = sld [smem:[#allocation0]]
  $region61: #{tpu_custom_call.1} parent=0
    _
  %s7 = ssub.s32 1, %s5
  %s8 = scalar_select 0, %s7, %s5
  $region1: #{tpu_custom_call.1} parent=0
    #allocation2 [shape = 'u8[16384]{0}', space=vmem, size = 0x4000, scoped, tag = 'input window, operand 0, single buffered']
    #allocation3 [shape = 's32[2]{0}', space=sflag, size = 0x8, scoped, tag = 'scoped memory for tpu_custom_call.1']
    #allocation4 [shape = 's32[2]{0}', space=sflag, size = 0x8, scoped, tag = 'scoped memory for tpu_custom_call.1']
    #allocation5 [shape = 'u8[8192]{0}', space=vmem, size = 0x2000, scoped, tag = 'input window, operand 2']
    #allocation6 [shape = 's32[2]{0}', space=sflag, size = 0x8, scoped, tag = 'scoped memory for tpu_custom_call.1']
    #allocation7 [shape = 'u8[8192]{0}', space=vmem, size = 0x2000, scoped, tag = 'input window, operand 3']
    #allocation8 [shape = 'u8[8192]{0}', space=vmem, size = 0x2000, scoped, tag = 'output window, operand 0']
    %9 = vsyncpa [#allocation3], 0
    %10 = vsyncpa [#allocation6], 0
    %s11 = scalar_lea.sflag [#allocation6], 1
    %12 = vsyncpa %s11, 0
    %13 = vsyncpa [#allocation4], 0
    %s14 = scalar_lea.sflag [#allocation4], 1
    %15 = vsyncpa %s14, 0
    loop: start=0, step=1, limit=4
    $region2: #{tpu_custom_call.1} parent=1 // loop_pre_header
      _
    $region3: #{tpu_custom_call.1} parent=1 // loop_header
      %s17 = sphi 0, %s21
      %p18 = scmp.ge.s32.totalorder %s17, 4
      %s24 = sphi 0, %s36
      %s25 = sphi 0, %s32
      %s26 = sphi 0, %s24
      %s27 = sphi 0, %s25
      %s28 = sphi 0, %s26
      %s29 = sphi 0, %s27
      %s37 = sphi 0, %s37
      %s39 = sphi 0, %s37
      %s40 = sphi 0, %s39
      %s54 = sphi 0, %s40
      %s58 = sphi 0, %s58
      %s60 = sphi 0, %s58
      %s61 = sphi 0, %s60
      %s75 = sphi 0, %s61
      %s83 = sphi 0, %s85
      %s86 = sphi 0, %s83
      %s87 = sphi 0, %s86
      %s103 = sphi 0, %s87
      %s113 = sphi 0, %s115
      %s116 = sphi 0, %s113
      %s117 = sphi 0, %s116
      %s133 = sphi 0, %s117
      %s141 = sphi 0, %s143
      %s144 = sphi 0, %s141
      %s145 = sphi 0, %s144
      %s161 = sphi 0, %s145
    $region4: #{tpu_custom_call.1} parent=1 // loop_header_branch
      %20 = sbr.rel (%p18) target = $region8
    $region5: #{tpu_custom_call.1} parent=1 // loop_body
      %s22 = ssub.s32 %s17, 1
      %s23 = ssub.s32 %s17, 2
      %s30 = sadd.s32 1, %s25
      %p31 = scmp.ge.s32.totalorder %s30, 1
      %s32 = scalar_select %p31, 0, %s30
      %s33 = sadd.s32 1, %s24
      %s34 = scalar_select %p31, %s33, %s24
      %p35 = scmp.ge.s32.totalorder %s34, 2
      %s36 = scalar_select %p35, 0, %s34
      %s38 = sadd.s32 %s37, 1
      %p41 = scmp.eq.s32.totalorder %s17, 1
      %p42 = scmp.ne.s32.totalorder %s37, %s39
      %p43 = scmp.eq.s32.totalorder %s17, 0
      %p44 = por %p42, %p43
      %p45 = scmp.ne.s32.totalorder %s37, %s39
      %p46 = scmp.eq.s32.totalorder %s22, 1
      %p47 = por %p45, %p46
      %p48 = scmp.ne.s32.totalorder %s39, %s40
      %p49 = scmp.eq.s32.totalorder %s22, 0
      %p50 = por %p48, %p49
      %p51 = scmp.ne.s32.totalorder %s39, %s40
      %p52 = scmp.eq.s32.totalorder %s23, 1
      %p53 = por %p51, %p52
      %p55 = scmp.ne.s32.totalorder %s40, %s54
      %p56 = scmp.eq.s32.totalorder %s23, 0
      %p57 = por %p55, %p56
      %s59 = sadd.s32 %s58, 1
      %p62 = scmp.eq.s32.totalorder %s17, 1
      %p63 = scmp.ne.s32.totalorder %s58, %s60
      %p64 = scmp.eq.s32.totalorder %s17, 0
      %p65 = por %p63, %p64
      %p66 = scmp.ne.s32.totalorder %s58, %s60
      %p67 = scmp.eq.s32.totalorder %s22, 1
      %p68 = por %p66, %p67
      %p69 = scmp.ne.s32.totalorder %s60, %s61
      %p70 = scmp.eq.s32.totalorder %s22, 0
      %p71 = por %p69, %p70
      %p72 = scmp.ne.s32.totalorder %s60, %s61
      %p73 = scmp.eq.s32.totalorder %s23, 1
      %p74 = por %p72, %p73
      %p76 = scmp.ne.s32.totalorder %s61, %s75
      %p77 = scmp.eq.s32.totalorder %s23, 0
      %p78 = por %p76, %p77
      %s79 = ssub.s32 %s24, %s36
      %s80 = ssub.s32 %s25, %s32
      %s81 = sor.u32 %s79, %s80
      %p82 = scmp.eq.s32.totalorder %s81, 0
      %s84 = sadd.s32 %s83, 1
      %s85 = scalar_select %p82, %s83, %s84
      %p88 = pneg %p82
      %p89 = scmp.eq.s32.totalorder %s17, 1
      %p90 = por %p88, %p89
      %p91 = scmp.ne.s32.totalorder %s83, %s86
      %p92 = scmp.eq.s32.totalorder %s17, 0
      %p93 = por %p91, %p92
      %p94 = scmp.ne.s32.totalorder %s83, %s86
      %p95 = scmp.eq.s32.totalorder %s22, 1
      %p96 = por %p94, %p95
      %p97 = scmp.ne.s32.totalorder %s86, %s87
      %p98 = scmp.eq.s32.totalorder %s22, 0
      %p99 = por %p97, %p98
      %p100 = scmp.ne.s32.totalorder %s86, %s87
      %p101 = scmp.eq.s32.totalorder %s23, 1
      %p102 = por %p100, %p101
      %p104 = scmp.ne.s32.totalorder %s87, %s103
      %p105 = scmp.eq.s32.totalorder %s23, 0
      %p106 = por %p104, %p105
      %s107 = sadd.s32 %s25, 1
      %s108 = sadd.s32 %s32, 1
      %s109 = ssub.s32 %s24, %s36
      %s110 = ssub.s32 %s107, %s108
      %s111 = sor.u32 %s109, %s110
      %p112 = scmp.eq.s32.totalorder %s111, 0
      %s114 = sadd.s32 %s113, 1
      %s115 = scalar_select %p112, %s113, %s114
      %p118 = pneg %p112
      %p119 = scmp.eq.s32.totalorder %s17, 1
      %p120 = por %p118, %p119
      %p121 = scmp.ne.s32.totalorder %s113, %s116
      %p122 = scmp.eq.s32.totalorder %s17, 0
      %p123 = por %p121, %p122
      %p124 = scmp.ne.s32.totalorder %s113, %s116
      %p125 = scmp.eq.s32.totalorder %s22, 1
      %p126 = por %p124, %p125
      %p127 = scmp.ne.s32.totalorder %s116, %s117
      %p128 = scmp.eq.s32.totalorder %s22, 0
      %p129 = por %p127, %p128
      %p130 = scmp.ne.s32.totalorder %s116, %s117
      %p131 = scmp.eq.s32.totalorder %s23, 1
      %p132 = por %p130, %p131
      %p134 = scmp.ne.s32.totalorder %s117, %s133
      %p135 = scmp.eq.s32.totalorder %s23, 0
      %p136 = por %p134, %p135
      %s137 = ssub.s32 %s24, %s36
      %s138 = ssub.s32 %s25, %s32
      %s139 = sor.u32 %s137, %s138
      %p140 = scmp.eq.s32.totalorder %s139, 0
      %s142 = sadd.s32 %s141, 1
      %s143 = scalar_select %p140, %s141, %s142
      %p146 = pneg %p140
      %p147 = scmp.eq.s32.totalorder %s17, 1
      %p148 = por %p146, %p147
      %p149 = scmp.ne.s32.totalorder %s141, %s144
      %p150 = scmp.eq.s32.totalorder %s17, 0
      %p151 = por %p149, %p150
      %p152 = scmp.ne.s32.totalorder %s141, %s144
      %p153 = scmp.eq.s32.totalorder %s22, 1
      %p154 = por %p152, %p153
      %p155 = scmp.ne.s32.totalorder %s144, %s145
      %p156 = scmp.eq.s32.totalorder %s22, 0
      %p157 = por %p155, %p156
      %p158 = scmp.ne.s32.totalorder %s144, %s145
      %p159 = scmp.eq.s32.totalorder %s23, 1
      %p160 = por %p158, %p159
      %p162 = scmp.ne.s32.totalorder %s145, %s161
      %p163 = scmp.eq.s32.totalorder %s23, 0
      %p164 = por %p162, %p163
      %p165 = scmp.le.s32.totalorder 1, %s17
      %p166 = scmp.lt.s32.totalorder %s17, 3
      %p167 = pnand %p165, %p166
      %p168 = pneg %p167
      // Predicated region
      $region9: #{tpu_custom_call.1} parent=5 // pred_check
        _
      $region10: #{tpu_custom_call.1} parent=5 // pred_check_branch
        %170 = sbr.rel (%p167) target = $region12
      $region11: #{tpu_custom_call.1} parent=5 // pred_region
        %s171 = ssub.s32 %s17, 1
        // Predicated region
        $region13: #{tpu_custom_call.1} parent=11 // pred_check
          %p172 = pneg %p50
        $region14: #{tpu_custom_call.1} parent=11 // pred_check_branch
          %174 = sbr.rel (%p172) target = $region16
        $region15: #{tpu_custom_call.1} parent=11 // pred_region
          %s176 = ssub.s32 512, 512
          %177 = vsyncadd [#allocation3], %s176
          %s178 = sshll.u32 [#allocation2], 4
          %s179 = int_to_ptr.vmem [resolvable:$true] %s178
          %184 = dma.hbm_to_vmem [thread:$0]  %s0, 512, %s179, [#allocation3], 64, 64, 4
        $region16: #{tpu_custom_call.1} parent=11 // pred_fallthru
          _
        // Predicated region
        $region17: #{tpu_custom_call.1} parent=11 // pred_check
          %p185 = pneg %p71
        $region18: #{tpu_custom_call.1} parent=11 // pred_check_branch
          %187 = sbr.rel (%p185) target = $region20
        $region19: #{tpu_custom_call.1} parent=11 // pred_region
          _
        $region20: #{tpu_custom_call.1} parent=11 // pred_fallthru
          _
      $region12: #{tpu_custom_call.1} parent=5 // pred_fallthru
        _
      %p188 = scmp.lt.s32.totalorder %s17, 2
      // Predicated region
      $region21: #{tpu_custom_call.1} parent=5 // pred_check
        %p189 = pneg %p188
      $region22: #{tpu_custom_call.1} parent=5 // pred_check_branch
        %191 = sbr.rel (%p189) target = $region24
      $region23: #{tpu_custom_call.1} parent=5 // pred_region
        // Predicated region
        $region25: #{tpu_custom_call.1} parent=23 // pred_check
          %p192 = pneg %p93
        $region26: #{tpu_custom_call.1} parent=23 // pred_check_branch
          %194 = sbr.rel (%p192) target = $region28
        $region27: #{tpu_custom_call.1} parent=23 // pred_region
          %s195 = sand.u32 %s17, 1
          %s196 = scalar_lea.sflag [#allocation6], %s195
          %s197 = sand.u32 %s83, 1
          %s198 = smul.addr %s197, 8
          %s199 = scalar_lea.vmem [#allocation5], %s198
          %s201 = ssub.s32 128, 128
          %202 = vsyncadd %s196, %s201
          %s203 = smul.addr %s24, 4
          %s204 = sadd.s32 %s25, %s203
          %s205 = smul.addr %s204, 64
          %s206 = scalar_lea.hbm %s2, %s205
          %s207 = sshll.u32 %s199, 4
          %s208 = int_to_ptr.vmem [resolvable:$true] %s207
          %213 = dma.hbm_to_vmem [thread:$0]  %s206, 128, %s208, %s196, 128, 64, 4
        $region28: #{tpu_custom_call.1} parent=23 // pred_fallthru
          _
        // Predicated region
        $region29: #{tpu_custom_call.1} parent=23 // pred_check
          %p214 = pneg %p123
        $region30: #{tpu_custom_call.1} parent=23 // pred_check_branch
          %216 = sbr.rel (%p214) target = $region32
        $region31: #{tpu_custom_call.1} parent=23 // pred_region
          %s217 = sand.u32 %s17, 1
          %s218 = scalar_lea.sflag [#allocation6], %s217
          %s219 = sand.u32 %s113, 1
          %s220 = smul.addr %s219, 8
          %s221 = scalar_lea.vmem [#allocation7], %s220
          %s222 = sadd.s32 %s25, 1
          %s224 = ssub.s32 128, 128
          %225 = vsyncadd %s218, %s224
          %s226 = smul.addr %s24, 4
          %s227 = sadd.s32 %s222, %s226
          %s228 = smul.addr %s227, 64
          %s229 = scalar_lea.hbm %s3, %s228
          %s230 = sshll.u32 %s221, 4
          %s231 = int_to_ptr.vmem [resolvable:$true] %s230
          %236 = dma.hbm_to_vmem [thread:$0]  %s229, 128, %s231, %s218, 128, 64, 4
        $region32: #{tpu_custom_call.1} parent=23 // pred_fallthru
          _
      $region24: #{tpu_custom_call.1} parent=5 // pred_fallthru
        _
      %p237 = scmp.le.s32.totalorder 1, %s17
      %p238 = scmp.lt.s32.totalorder %s17, 3
      %p239 = pnand %p237, %p238
      %p240 = pneg %p239
      // Predicated region
      $region33: #{tpu_custom_call.1} parent=5 // pred_check
        _
      $region34: #{tpu_custom_call.1} parent=5 // pred_check_branch
        %242 = sbr.rel (%p239) target = $region36
      $region35: #{tpu_custom_call.1} parent=5 // pred_region
        %s243 = ssub.s32 %s17, 1
        // Predicated region
        $region37: #{tpu_custom_call.1} parent=35 // pred_check
          %p244 = pneg %p50
        $region38: #{tpu_custom_call.1} parent=35 // pred_check_branch
          %246 = sbr.rel (%p244) target = $region40
        $region39: #{tpu_custom_call.1} parent=35 // pred_region
          %247 = dma.done [#allocation3], 512
        $region40: #{tpu_custom_call.1} parent=35 // pred_fallthru
          _
        %s248 = sand.u32 %s22, 1
        %s249 = scalar_lea.sflag [#allocation6], %s248
        %s250 = sand.u32 %s86, 1
        %s251 = smul.addr %s250, 8
        %s252 = scalar_lea.vmem [#allocation5], %s251
        // Predicated region
        $region41: #{tpu_custom_call.1} parent=35 // pred_check
          %p253 = pneg %p99
        $region42: #{tpu_custom_call.1} parent=35 // pred_check_branch
          %255 = sbr.rel (%p253) target = $region44
        $region43: #{tpu_custom_call.1} parent=35 // pred_region
          %256 = dma.done %s249, 128
        $region44: #{tpu_custom_call.1} parent=35 // pred_fallthru
          _
        %s257 = sand.u32 %s22, 1
        %s258 = scalar_lea.sflag [#allocation6], %s257
        %s259 = sand.u32 %s116, 1
        %s260 = smul.addr %s259, 8
        %s261 = scalar_lea.vmem [#allocation7], %s260
        // Predicated region
        $region45: #{tpu_custom_call.1} parent=35 // pred_check
          %p262 = pneg %p129
        $region46: #{tpu_custom_call.1} parent=35 // pred_check_branch
          %264 = sbr.rel (%p262) target = $region48
        $region47: #{tpu_custom_call.1} parent=35 // pred_region
          %265 = dma.done %s258, 128
        $region48: #{tpu_custom_call.1} parent=35 // pred_fallthru
          _
        %p266 = pneg %p50
        %p267 = pneg %p47
        %p268 = pneg %p71
        %p269 = pneg %p68
        %s270 = sand.u32 %s22, 1
        %s271 = scalar_lea.sflag [#allocation6], %s270
        %s272 = sand.u32 %s86, 1
        %s273 = smul.addr %s272, 8
        %s274 = scalar_lea.vmem [#allocation5], %s273
        %p275 = pneg %p99
        %p276 = pneg %p96
        %s277 = sand.u32 %s22, 1
        %s278 = scalar_lea.sflag [#allocation6], %s277
        %s279 = sand.u32 %s116, 1
        %s280 = smul.addr %s279, 8
        %s281 = scalar_lea.vmem [#allocation7], %s280
        %p282 = pneg %p129
        %p283 = pneg %p126
        %p284 = pneg %p157
        %p285 = pneg %p154
        %s286 = sand.u32 %s144, 1
        %s287 = scalar_lea.sflag [#allocation4], %s286
        %s288 = sand.u32 %s144, 1
        %s289 = smul.addr %s288, 8
        %s290 = scalar_lea.vmem [#allocation8], %s289
        %s291 = sadd.s32 %s27, 1
        %v293 = vld [vmem:[%s252] sm:$0xf]
        %v294 = vld [vmem:[%s252 + $0x4] sm:$0xf]
        %v295 = vld [vmem:[%s261] sm:$0xf]
        %v296 = vld [vmem:[%s261 + $0x4] sm:$0xf]
        %v299 = vunpack.c.l.b16 %v293
        %v300 = vunpack.c.l.b16 %v294
        %v301 = vpack.c.b16 %v300, %v299
        %v305 = vunpack.c.l.b16 %v295
        %v306 = vunpack.c.l.b16 %v296
        %v307 = vpack.c.b16 %v306, %v305
        %v308 = vld [vmem:[#allocation2] sm:$0xf]
        %v309 = vld [vmem:[#allocation2 + $0x4] sm:$0xf]
        %s310 = scalar_lea.vmem [#allocation2], 8
        %v311 = vld [vmem:[%s310] sm:$0xf]
        %v312 = vld [vmem:[%s310 + $0x4] sm:$0xf]
        %v315 = vunpack.c.l.b16 %v311
        %v316 = vunpack.c.l.b16 %v312
        %v317 = vpack.c.b16 %v316, %v315
        %318 = vrot.lane.b32.xlu0 %v301, 127
        %v319 = vpop.permute.xlu0 %318
        %320 = vrot.lane.b32.xlu0 %v307, 127
        %v321 = vpop.permute.xlu0 %320
        %vm322 = vcmask 1039360
        %v323 = vsel %vm322, %v319, %v321
        %vm325 = vcmask 130048
        %v327 = vsel %vm325, %v317, 0
        %329 = vmatprep.subr.bf16.mxu0 0
        %330 = vmatpush1.bf16.msra.mxu0 %v323
        %331 = vmatprep.subr.bf16.mxu0 0
        %332 = vmatpush1.bf16.msra.mxu0 0
        %333 = vmatprep.subr.bf16.mxu0 0
        %334 = vmatpush1.bf16.msra.mxu0 0
        %335 = vmatprep.subr.bf16.mxu0 0
        %336 = vmatpush1.bf16.msra.mxu0 0
        %337 = vmatprep.subr.bf16.mxu0 0
        %338 = vmatpush1.bf16.msra.mxu0 0
        %339 = vmatprep.subr.bf16.mxu0 0
        %340 = vmatpush1.bf16.msra.mxu0 0
        %341 = vmatprep.subr.bf16.mxu0 0
        %342 = vmatpush1.bf16.msra.mxu0 0
        %343 = vmatprep.subr.bf16.mxu0 0
        %344 = vmatpush1.bf16.msra.mxu0 0
        %345 = vmatprep.subr.bf16.mxu0 0
        %346 = vmatpush1.bf16.msra.mxu0 0
        %347 = vmatprep.subr.bf16.mxu0 0
        %348 = vmatpush1.bf16.msra.mxu0 0
        %349 = vmatprep.subr.bf16.mxu0 0
        %350 = vmatpush1.bf16.msra.mxu0 0
        %351 = vmatprep.subr.bf16.mxu0 0
        %352 = vmatpush1.bf16.msra.mxu0 0
        %353 = vmatprep.subr.bf16.mxu0 0
        %354 = vmatpush1.bf16.msra.mxu0 0
        %355 = vmatprep.subr.bf16.mxu0 0
        %356 = vmatpush1.bf16.msra.mxu0 0
        %357 = vmatprep.subr.bf16.mxu0 0
        %358 = vmatpush1.bf16.msra.mxu0 0
        %359 = vmatprep.subr.bf16.mxu0 0
        %360 = vmatpush1.bf16.msra.mxu0 0
        %361 = vmatprep.mubr.bf16.mxu0 0
        %362 = vmatmul.mubr.bf16.gmra.mrb[0].mxu0 %v327
        %v363 = vpop.f32.mrb[0].mxu0
        %v364 = vadd.f32 0.0, %v363
        %v365 = vpop.f32.mrb[0].mxu0
        %v366 = vpop.f32.mrb[0].mxu0
        %v367 = vadd.f32 0.0, %v366
        %v368 = vpop.f32.mrb[0].mxu0
        %369 = vdwg.mxu0
        %v372 = vunpack.c.l.b16 %v308
        %v373 = vunpack.c.l.b16 %v309
        %v374 = vpack.c.b16 %v373, %v372
        %v376 = vsel %vm325, %v374, 0
        %378 = vmatprep.subr.bf16.mxu0 0
        %379 = vmatpush1.bf16.msra.mxu0 %v301
        %380 = vmatprep.subr.bf16.mxu0 0
        %381 = vmatpush1.bf16.msra.mxu0 0
        %382 = vmatprep.subr.bf16.mxu0 0
        %383 = vmatpush1.bf16.msra.mxu0 0
        %384 = vmatprep.subr.bf16.mxu0 0
        %385 = vmatpush1.bf16.msra.mxu0 0
        %386 = vmatprep.subr.bf16.mxu0 0
        %387 = vmatpush1.bf16.msra.mxu0 0
        %388 = vmatprep.subr.bf16.mxu0 0
        %389 = vmatpush1.bf16.msra.mxu0 0
        %390 = vmatprep.subr.bf16.mxu0 0
        %391 = vmatpush1.bf16.msra.mxu0 0
        %392 = vmatprep.subr.bf16.mxu0 0
        %393 = vmatpush1.bf16.msra.mxu0 0
        %394 = vmatprep.subr.bf16.mxu0 0
        %395 = vmatpush1.bf16.msra.mxu0 0
        %396 = vmatprep.subr.bf16.mxu0 0
        %397 = vmatpush1.bf16.msra.mxu0 0
        %398 = vmatprep.subr.bf16.mxu0 0
        %399 = vmatpush1.bf16.msra.mxu0 0
        %400 = vmatprep.subr.bf16.mxu0 0
        %401 = vmatpush1.bf16.msra.mxu0 0
        %402 = vmatprep.subr.bf16.mxu0 0
        %403 = vmatpush1.bf16.msra.mxu0 0
        %404 = vmatprep.subr.bf16.mxu0 0
        %405 = vmatpush1.bf16.msra.mxu0 0
        %406 = vmatprep.subr.bf16.mxu0 0
        %407 = vmatpush1.bf16.msra.mxu0 0
        %408 = vmatprep.subr.bf16.mxu0 0
        %409 = vmatpush1.bf16.msra.mxu0 0
        %410 = vmatprep.mubr.bf16.mxu0 0
        %411 = vmatmul.mubr.bf16.gmra.mrb[0].mxu0 %v376
        %v412 = vpop.f32.mrb[0].mxu0
        %v413 = vadd.f32 %v364, %v412
        %v414 = vpop.f32.mrb[0].mxu0
        %v415 = vpop.f32.mrb[0].mxu0
        %v416 = vadd.f32 %v367, %v415
        %v417 = vpop.f32.mrb[0].mxu0
        %418 = vdwg.mxu0
        %s419 = scalar_lea.vmem [#allocation2], 16
        %v420 = vld [vmem:[%s419] sm:$0xf]
        %v421 = vld [vmem:[%s419 + $0x4] sm:$0xf]
        %v424 = vunpack.c.l.b16 %v420
        %v425 = vunpack.c.l.b16 %v421
        %v426 = vpack.c.b16 %v425, %v424
        %427 = vrot.lane.b32.xlu0 %v301, 119
        %v428 = vpop.permute.xlu0 %427
        %429 = vrot.lane.b32.xlu0 %v307, 119
        %v430 = vpop.permute.xlu0 %429
        %vm431 = vcmask 973824
        %v432 = vsel %vm431, %v428, %v430
        %v435 = vsel %vm325, %v426, 0
        %437 = vmatprep.subr.bf16.mxu0 0
        %438 = vmatpush1.bf16.msra.mxu0 %v432
        %439 = vmatprep.subr.bf16.mxu0 0
        %440 = vmatpush1.bf16.msra.mxu0 0
        %441 = vmatprep.subr.bf16.mxu0 0
        %442 = vmatpush1.bf16.msra.mxu0 0
        %443 = vmatprep.subr.bf16.mxu0 0
        %444 = vmatpush1.bf16.msra.mxu0 0
        %445 = vmatprep.subr.bf16.mxu0 0
        %446 = vmatpush1.bf16.msra.mxu0 0
        %447 = vmatprep.subr.bf16.mxu0 0
        %448 = vmatpush1.bf16.msra.mxu0 0
        %449 = vmatprep.subr.bf16.mxu0 0
        %450 = vmatpush1.bf16.msra.mxu0 0
        %451 = vmatprep.subr.bf16.mxu0 0
        %452 = vmatpush1.bf16.msra.mxu0 0
        %453 = vmatprep.subr.bf16.mxu0 0
        %454 = vmatpush1.bf16.msra.mxu0 0
        %455 = vmatprep.subr.bf16.mxu0 0
        %456 = vmatpush1.bf16.msra.mxu0 0
        %457 = vmatprep.subr.bf16.mxu0 0
        %458 = vmatpush1.bf16.msra.mxu0 0
        %459 = vmatprep.subr.bf16.mxu0 0
        %460 = vmatpush1.bf16.msra.mxu0 0
        %461 = vmatprep.subr.bf16.mxu0 0
        %462 = vmatpush1.bf16.msra.mxu0 0
        %463 = vmatprep.subr.bf16.mxu0 0
        %464 = vmatpush1.bf16.msra.mxu0 0
        %465 = vmatprep.subr.bf16.mxu0 0
        %466 = vmatpush1.bf16.msra.mxu0 0
        %467 = vmatprep.subr.bf16.mxu0 0
        %468 = vmatpush1.bf16.msra.mxu0 0
        %469 = vmatprep.mubr.bf16.mxu0 0
        %470 = vmatmul.mubr.bf16.gmra.mrb[0].mxu0 %v435
        %v471 = vpop.f32.mrb[0].mxu0
        %v472 = vadd.f32 0.0, %v471
        %v473 = vpop.f32.mrb[0].mxu0
        %v474 = vpop.f32.mrb[0].mxu0
        %v475 = vadd.f32 0.0, %v474
        %v476 = vpop.f32.mrb[0].mxu0
        %477 = vdwg.mxu0
        %v478 = vadd.f32 %v413, %v472
        %v479 = vadd.f32 %v416, %v475
        %s480 = scalar_lea.vmem [#allocation2], 24
        %v481 = vld [vmem:[%s480] sm:$0xf]
        %v482 = vld [vmem:[%s480 + $0x4] sm:$0xf]
        %v485 = vunpack.c.l.b16 %v481
        %v486 = vunpack.c.l.b16 %v482
        %v487 = vpack.c.b16 %v486, %v485
        %488 = vrot.lane.b32.xlu0 %v301, 118
        %v489 = vpop.permute.xlu0 %488
        %490 = vrot.lane.b32.xlu0 %v307, 118
        %v491 = vpop.permute.xlu0 %490
        %vm492 = vcmask 965632
        %v493 = vsel %vm492, %v489, %v491
        %v496 = vsel %vm325, %v487, 0
        %498 = vmatprep.subr.bf16.mxu0 0
        %499 = vmatpush1.bf16.msra.mxu0 %v493
        %500 = vmatprep.subr.bf16.mxu0 0
        %501 = vmatpush1.bf16.msra.mxu0 0
        %502 = vmatprep.subr.bf16.mxu0 0
        %503 = vmatpush1.bf16.msra.mxu0 0
        %504 = vmatprep.subr.bf16.mxu0 0
        %505 = vmatpush1.bf16.msra.mxu0 0
        %506 = vmatprep.subr.bf16.mxu0 0
        %507 = vmatpush1.bf16.msra.mxu0 0
        %508 = vmatprep.subr.bf16.mxu0 0
        %509 = vmatpush1.bf16.msra.mxu0 0
        %510 = vmatprep.subr.bf16.mxu0 0
        %511 = vmatpush1.bf16.msra.mxu0 0
        %512 = vmatprep.subr.bf16.mxu0 0
        %513 = vmatpush1.bf16.msra.mxu0 0
        %514 = vmatprep.subr.bf16.mxu0 0
        %515 = vmatpush1.bf16.msra.mxu0 0
        %516 = vmatprep.subr.bf16.mxu0 0
        %517 = vmatpush1.bf16.msra.mxu0 0
        %518 = vmatprep.subr.bf16.mxu0 0
        %519 = vmatpush1.bf16.msra.mxu0 0
        %520 = vmatprep.subr.bf16.mxu0 0
        %521 = vmatpush1.bf16.msra.mxu0 0
        %522 = vmatprep.subr.bf16.mxu0 0
        %523 = vmatpush1.bf16.msra.mxu0 0
        %524 = vmatprep.subr.bf16.mxu0 0
        %525 = vmatpush1.bf16.msra.mxu0 0
        %526 = vmatprep.subr.bf16.mxu0 0
        %527 = vmatpush1.bf16.msra.mxu0 0
        %528 = vmatprep.subr.bf16.mxu0 0
        %529 = vmatpush1.bf16.msra.mxu0 0
        %530 = vmatprep.mubr.bf16.mxu0 0
        %531 = vmatmul.mubr.bf16.gmra.mrb[0].mxu0 %v496
        %v532 = vpop.f32.mrb[0].mxu0
        %v533 = vadd.f32 0.0, %v532
        %v534 = vpop.f32.mrb[0].mxu0
        %v535 = vpop.f32.mrb[0].mxu0
        %v536 = vadd.f32 0.0, %v535
        %v537 = vpop.f32.mrb[0].mxu0
        %538 = vdwg.mxu0
        %v539 = vadd.f32 %v478, %v533
        %v540 = vadd.f32 %v479, %v536
        %v541 = vld [vmem:[%s1] sm:$0xff]
        %v542 = vld [vmem:[%s1 + $0x8] sm:$0xff]
        %544 = vset.pattern.permute.xlu0 0
        %545 = vperm.xlu0 %544, %v541
        %v546 = vpop.permute.xlu0 %545
        %549 = vset.pattern.permute.xlu0 0
        %550 = vperm.xlu0 %549, %v542
        %v551 = vpop.permute.xlu0 %550
        %v553 = vadd.f32 %v539, %v546
        %v554 = vadd.f32 %v540, %v551
        %v555 = vmul.f32 %v553, 0.2
        %v556 = vmul.f32 %v554, 0.2
        %v557 = vmax.f32 %v553, %v555
        %v558 = vmax.f32 %v554, %v556
        %v559 = vpack.c.bf16 %v558, %v557
        %v561 = vunpack.c.l.b16 %v559
        %v562 = vunpack.c.h.b16 %v559
        %v563 = vpack.c.b16 %v561, %v561
        %v564 = vpack.c.b16 %v562, %v562
        %567 = vst [vmem:[%s290] sm:$0xf] %v563
        %568 = vst [vmem:[%s290 + $0x4] sm:$0xf] %v564
        %s569 = sand.u32 %s144, 1
        %s570 = scalar_lea.sflag [#allocation4], %s569
        %s571 = sand.u32 %s144, 1
        %s572 = smul.addr %s571, 8
        %s573 = scalar_lea.vmem [#allocation8], %s572
        // Predicated region
        $region49: #{tpu_custom_call.1} parent=35 // pred_check
          %p574 = pneg %p154
        $region50: #{tpu_custom_call.1} parent=35 // pred_check_branch
          %576 = sbr.rel (%p574) target = $region52
        $region51: #{tpu_custom_call.1} parent=35 // pred_region
          %s578 = ssub.s32 128, 128
          %579 = vsyncadd %s570, %s578
          %s580 = smul.addr %s26, 2
          %s581 = sadd.s32 %s27, %s580
          %s582 = smul.addr %s581, 64
          %s583 = scalar_lea.hbm %s4, %s582
          %s584 = sshll.u32 %s573, 4
          %s585 = int_to_ptr.vmem [resolvable:$true] %s584
          %590 = dma.vmem_to_hbm [thread:$0]  %s585, 128, %s583, %s570, 64, 64, 4
        $region52: #{tpu_custom_call.1} parent=35 // pred_fallthru
          _
      $region36: #{tpu_custom_call.1} parent=5 // pred_fallthru
        _
      %p591 = scmp.le.s32.totalorder 2, %s17
      // Predicated region
      $region53: #{tpu_custom_call.1} parent=5 // pred_check
        %p592 = pneg %p591
      $region54: #{tpu_custom_call.1} parent=5 // pred_check_branch
        %594 = sbr.rel (%p592) target = $region56
      $region55: #{tpu_custom_call.1} parent=5 // pred_region
        %s595 = ssub.s32 %s17, 2
        // Predicated region
        $region57: #{tpu_custom_call.1} parent=55 // pred_check
          %p596 = pneg %p160
        $region58: #{tpu_custom_call.1} parent=55 // pred_check_branch
          %598 = sbr.rel (%p596) target = $region60
        $region59: #{tpu_custom_call.1} parent=55 // pred_region
          %s599 = sand.u32 %s145, 1
          %s600 = scalar_lea.sflag [#allocation4], %s599
          %s601 = sand.u32 %s145, 1
          %s602 = smul.addr %s601, 8
          %s603 = scalar_lea.vmem [#allocation8], %s602
          %604 = dma.done %s600, 128
        $region60: #{tpu_custom_call.1} parent=55 // pred_fallthru
          _
      $region56: #{tpu_custom_call.1} parent=5 // pred_fallthru
        _
    $region6: #{tpu_custom_call.1} parent=1 // loop_footer
      %s21 = sadd.s32 1, %s17
    $region7: #{tpu_custom_call.1} parent=1 // loop_footer_branch
      %16 = sbr.rel target = $region3
    $region8: #{tpu_custom_call.1} parent=1 // loop_exit
      _
    %605 = vsyncpa [#allocation3], 1
    %s606 = scalar_lea.sflag [#allocation3], 1
    %607 = vsyncpa %s606, 1
    %608 = vsyncpa [#allocation6], 1
    %s609 = scalar_lea.sflag [#allocation6], 1
    %610 = vsyncpa %s609, 1
    %611 = vsyncpa [#allocation4], 1
    %s612 = scalar_lea.sflag [#allocation4], 1
    %613 = vsyncpa %s612, 1

</llo_original>
